<compile_context>
chip_gen: v5e
topology: v5e:2x2
jax: 0.10.0
libtpu: 0.0.40
codegen_flags: <defaults>
</compile_context>

<pallas_src>
import functools

import jax
import jax.numpy as jnp
from jax import lax
from jax.experimental import pallas as pl
from jax.experimental.pallas import tpu as pltpu


def _round_up(n, m):
    return (n + m - 1) // m * m


def _dynamics_kernel(x_ref, w1_ref, b1_ref, w2_ref, b2_ref, wh_ref, bh_ref,
                     out_ref):
    """One batch tile.

    x_ref  : (bb, I)  natural batch-major layout (f32 in; cast in-kernel).
    w*_ref : PyTorch (out_features, in_features) orientation, VMEM-resident.
    b*_ref : (out_features, 1) f32 columns.
    out_ref: (2L, bb) fused [mu; logvar], lane-dense on the batch axis.
    """
    cd = w1_ref.dtype
    x = x_ref[...].astype(cd)                                       # (bb, I)
    # h1 = W1 @ x^T : contract the feature axis of both operands -> (H, bb).
    h1 = lax.dot_general(w1_ref[...], x,
                         dimension_numbers=(((1,), (1,)), ((), ())),
                         preferred_element_type=jnp.float32)
    h1 = jnp.maximum(h1 + b1_ref[...], 0.0).astype(cd)              # (H, bb)
    h2 = jnp.dot(w2_ref[...], h1, preferred_element_type=jnp.float32)
    h2 = jnp.maximum(h2 + b2_ref[...], 0.0).astype(cd)              # (H, bb)
    out = jnp.dot(wh_ref[...], h2,
                  preferred_element_type=jnp.float32) + bh_ref[...]  # (2L, bb)
    out_ref[...] = out.astype(out_ref.dtype)


def prepare_params(params, compute_dtype=jnp.float32):
    """One-time packing (call outside the hot path):
    fuses the mu/logvar heads, shapes biases as f32 columns, and casts weights
    to `compute_dtype` exactly once."""
    w1, b1, w2, b2, wmu, bmu, wlv, blv = params
    col = lambda b: jnp.asarray(b).reshape(-1, 1).astype(jnp.float32)
    w_head = jnp.concatenate([wmu, wlv], axis=0).astype(compute_dtype)  # (2L,H)
    b_head = jnp.concatenate([col(bmu), col(blv)], axis=0)              # (2L,1)
    return (w1.astype(compute_dtype), col(b1),
            w2.astype(compute_dtype), col(b2),
            w_head, b_head)


@functools.partial(jax.jit, static_argnames=("block_b",))
def dynamics_forward(x, prepared_params, *, block_b=2048):
    """x: (batch, input_dim) f32. Returns (mu, logvar), each (batch, latent_dim)."""
    w1, b1, w2, b2, wh, bh = prepared_params
    batch, input_dim = x.shape
    hidden_dim = w1.shape[0]
    two_l = wh.shape[0]
    latent_dim = two_l // 2
    out_dtype = jnp.float32

    assert block_b % 128 == 0, "block_b must be a multiple of 128 (lane width)"
    # Lane-dense batch tile.  For batch >= 256 cap the tile at half the padded
    # batch so grid >= 2 and ("parallel",) can shard across v7x's 2 TCs.
    b_pad128 = _round_up(batch, 128)
    bb = min(block_b, b_pad128)
    if batch >= 256:
        bb = min(bb, _round_up(pl.cdiv(b_pad128, 2), 128))
    b_pad = _round_up(batch, bb)
    grid = (b_pad // bb,)

    # Natural layout: no wrapper-side transpose or dtype cast of x.
    xp = x if b_pad == batch else jnp.pad(x, ((0, b_pad - batch), (0, 0)))

    resident = lambda r, c: pl.BlockSpec((r, c), lambda i: (0, 0))
    # Deeper pipelining on the streamed tiles once there is enough to overlap.
    stream_kwargs = {"pipeline_mode": pl.Buffered(3)} if grid[0] >= 3 else {}
    x_spec = pl.BlockSpec((bb, input_dim), lambda i: (i, 0), **stream_kwargs)
    out_spec = pl.BlockSpec((two_l, bb), lambda i: (0, i), **stream_kwargs)

    w_bytes = (input_dim * hidden_dim + hidden_dim * hidden_dim
               + hidden_dim * two_l) * jnp.dtype(w1.dtype).itemsize
    flops = 2 * b_pad * (input_dim * hidden_dim + hidden_dim * hidden_dim
                         + hidden_dim * two_l)
    bytes_accessed = (input_dim * b_pad * jnp.dtype(x.dtype).itemsize  # x
                      + w_bytes                                        # weights
                      + (2 * hidden_dim + two_l) * 4                   # biases
                      + two_l * b_pad * jnp.dtype(out_dtype).itemsize)  # output

    outT = pl.pallas_call(
        _dynamics_kernel,
        out_shape=jax.ShapeDtypeStruct((two_l, b_pad), out_dtype),
        grid=grid,
        in_specs=[
            x_spec,                              # x tile   (bb, I)
            resident(hidden_dim, input_dim),     # w1       (H, I)
            resident(hidden_dim, 1),             # b1       (H, 1)
            resident(hidden_dim, hidden_dim),    # w2       (H, H)
            resident(hidden_dim, 1),             # b2       (H, 1)
            resident(two_l, hidden_dim),         # w_head   (2L, H)
            resident(two_l, 1),                  # b_head   (2L, 1)
        ],
        out_specs=out_spec,
        compiler_params=pltpu.CompilerParams(
            dimension_semantics=("parallel",)),
        cost_estimate=pl.CostEstimate(flops=flops, transcendentals=0,
                                      bytes_accessed=bytes_accessed),
    )(xp, w1, b1, w2, b2, wh, bh)

    # Single un-transpose of the single fused slab, then split mu / logvar.
    out = outT.T[:batch]                         # (batch, 2L)
    return out[:, :latent_dim], out[:, latent_dim:]


def init_linear_params(key, in_features, out_features):
    # PyTorch nn.Linear init: U(-1/sqrt(fan_in), 1/sqrt(fan_in));
    # weight (out_features, in_features), bias (out_features,).
    kw, kb = jax.random.split(key)
    bound = 1.0 / (in_features ** 0.5)
    w = jax.random.uniform(kw, (out_features, in_features), jnp.float32,
                           minval=-bound, maxval=bound)
    b = jax.random.uniform(kb, (out_features,), jnp.float32,
                           minval=-bound, maxval=bound)
    return w, b


if __name__ == "__main__":
    input_dim, hidden_dim, latent_dim = 16, 32, 8
    batch = 8

    key = jax.random.PRNGKey(0)
    kx, k1, k2, k3, k4 = jax.random.split(key, 5)

    x = jax.random.normal(kx, (batch, input_dim), jnp.float32)
    w1, b1 = init_linear_params(k1, input_dim, hidden_dim)
    w2, b2 = init_linear_params(k2, hidden_dim, hidden_dim)
    wmu, bmu = init_linear_params(k3, hidden_dim, latent_dim)
    wlv, blv = init_linear_params(k4, hidden_dim, latent_dim)
    raw_params = (w1, b1, w2, b2, wmu, bmu, wlv, blv)

    # f32 everywhere to match the PyTorch module exactly (pass
    # compute_dtype=jnp.bfloat16 here to trade precision for DMA bytes).
    params = prepare_params(raw_params, compute_dtype=jnp.float32)

    mu, logvar = dynamics_forward(x, params)
    mu, logvar = jax.block_until_ready((mu, logvar))

    # Pure-JAX f32 reference mirroring the PyTorch DynamicsModel forward.
    hp = jax.lax.Precision.HIGHEST
    h1 = jnp.maximum(jnp.dot(x, w1.T, precision=hp) + b1, 0.0)
    h2 = jnp.maximum(jnp.dot(h1, w2.T, precision=hp) + b2, 0.0)
    mu_ref = jnp.dot(h2, wmu.T, precision=hp) + bmu
    lv_ref = jnp.dot(h2, wlv.T, precision=hp) + blv

    assert mu.shape == (batch, latent_dim)
    assert logvar.shape == (batch, latent_dim)
    assert jnp.allclose(mu, mu_ref, atol=1e-3, rtol=1e-3)
    assert jnp.allclose(logvar, lv_ref, atol=1e-3, rtol=1e-3)

    print("KERNEL_OK")
</pallas_src>

<mosaic_0001>
module attributes {stable_mosaic.version = 11 : i64} {
  func.func @_dynamics_kernel(%arg0: i32, %arg1: memref<128x16xf32, #tpu.memory_space<vmem>>, %arg2: memref<32x16xf32, #tpu.memory_space<vmem>>, %arg3: memref<32x1xf32, #tpu.memory_space<vmem>>, %arg4: memref<32x32xf32, #tpu.memory_space<vmem>>, %arg5: memref<32x1xf32, #tpu.memory_space<vmem>>, %arg6: memref<16x32xf32, #tpu.memory_space<vmem>>, %arg7: memref<16x1xf32, #tpu.memory_space<vmem>>, %arg8: memref<16x128xf32, #tpu.memory_space<vmem>>) attributes {dimension_semantics = [#tpu.dimension_semantics<parallel>], iteration_bounds = array<i64: 1>, scalar_prefetch = 0 : i64, scratch_operands = 0 : i64, tpu.core_type = #tpu.core_type<tc>, window_params = [{transform_indices = @transform_0, window_bounds = array<i64: 128, 16>}, {pipeline_mode = #tpu.pipeline_mode<synchronous>, transform_indices = @transform_1, window_bounds = array<i64: 32, 16>}, {pipeline_mode = #tpu.pipeline_mode<synchronous>, transform_indices = @transform_2, window_bounds = array<i64: 32, 1>}, {pipeline_mode = #tpu.pipeline_mode<synchronous>, transform_indices = @transform_3, window_bounds = array<i64: 32, 32>}, {pipeline_mode = #tpu.pipeline_mode<synchronous>, transform_indices = @transform_4, window_bounds = array<i64: 32, 1>}, {pipeline_mode = #tpu.pipeline_mode<synchronous>, transform_indices = @transform_5, window_bounds = array<i64: 16, 32>}, {pipeline_mode = #tpu.pipeline_mode<synchronous>, transform_indices = @transform_6, window_bounds = array<i64: 16, 1>}, {transform_indices = @transform_7, window_bounds = array<i64: 16, 128>}]} {
    %c0 = arith.constant 0 : index
    %c0_0 = arith.constant 0 : index
    %0 = vector.load %arg1[%c0, %c0_0] : memref<128x16xf32, #tpu.memory_space<vmem>>, vector<128x16xf32>
    %c0_1 = arith.constant 0 : index
    %c0_2 = arith.constant 0 : index
    %1 = vector.load %arg2[%c0_1, %c0_2] : memref<32x16xf32, #tpu.memory_space<vmem>>, vector<32x16xf32>
    %cst = arith.constant dense<0.000000e+00> : vector<32x128xf32>
    %2 = tpu.matmul %1, %0, %cst {dimension_numbers = #tpu.dot_dimension_numbers<[1], [1], [0], [0], [0, 0, 1, 0], [], []>} : vector<32x16xf32>, vector<128x16xf32>, vector<32x128xf32> -> vector<32x128xf32>
    %c0_3 = arith.constant 0 : index
    %c0_4 = arith.constant 0 : index
    %3 = vector.load %arg3[%c0_3, %c0_4] : memref<32x1xf32, #tpu.memory_space<vmem>>, vector<32x1xf32>
    %4 = vector.broadcast %3 : vector<32x1xf32> to vector<32x128xf32>
    %5 = arith.addf %2, %4 : vector<32x128xf32>
    %cst_5 = arith.constant 0.000000e+00 : f32
    %6 = vector.broadcast %cst_5 : f32 to vector<32x128xf32>
    %7 = arith.maximumf %5, %6 : vector<32x128xf32>
    %c0_6 = arith.constant 0 : index
    %c0_7 = arith.constant 0 : index
    %8 = vector.load %arg4[%c0_6, %c0_7] : memref<32x32xf32, #tpu.memory_space<vmem>>, vector<32x32xf32>
    %cst_8 = arith.constant dense<0.000000e+00> : vector<32x128xf32>
    %9 = tpu.matmul %8, %7, %cst_8 {dimension_numbers = #tpu.dot_dimension_numbers<[1], [0], [0], [1], [0, 0, 1, 1], [], []>} : vector<32x32xf32>, vector<32x128xf32>, vector<32x128xf32> -> vector<32x128xf32>
    %c0_9 = arith.constant 0 : index
    %c0_10 = arith.constant 0 : index
    %10 = vector.load %arg5[%c0_9, %c0_10] : memref<32x1xf32, #tpu.memory_space<vmem>>, vector<32x1xf32>
    %11 = vector.broadcast %10 : vector<32x1xf32> to vector<32x128xf32>
    %12 = arith.addf %9, %11 : vector<32x128xf32>
    %cst_11 = arith.constant 0.000000e+00 : f32
    %13 = vector.broadcast %cst_11 : f32 to vector<32x128xf32>
    %14 = arith.maximumf %12, %13 : vector<32x128xf32>
    %c0_12 = arith.constant 0 : index
    %c0_13 = arith.constant 0 : index
    %15 = vector.load %arg6[%c0_12, %c0_13] : memref<16x32xf32, #tpu.memory_space<vmem>>, vector<16x32xf32>
    %cst_14 = arith.constant dense<0.000000e+00> : vector<16x128xf32>
    %16 = tpu.matmul %15, %14, %cst_14 {dimension_numbers = #tpu.dot_dimension_numbers<[1], [0], [0], [1], [0, 0, 1, 1], [], []>} : vector<16x32xf32>, vector<32x128xf32>, vector<16x128xf32> -> vector<16x128xf32>
    %c0_15 = arith.constant 0 : index
    %c0_16 = arith.constant 0 : index
    %17 = vector.load %arg7[%c0_15, %c0_16] : memref<16x1xf32, #tpu.memory_space<vmem>>, vector<16x1xf32>
    %18 = vector.broadcast %17 : vector<16x1xf32> to vector<16x128xf32>
    %19 = arith.addf %16, %18 : vector<16x128xf32>
    %c0_17 = arith.constant 0 : index
    %c0_18 = arith.constant 0 : index
    %20 = vector.load %arg8[%c0_17, %c0_18] : memref<16x128xf32, #tpu.memory_space<vmem>>, vector<16x128xf32>
    tpu.vector_store %arg8[%c0_17, %c0_18], %19 {strides = array<i32>} : memref<16x128xf32, #tpu.memory_space<vmem>>, vector<16x128xf32>,
    return
  }
  func.func @transform_0(%arg0: i32) -> (i32, i32) {
    %c0_i32 = arith.constant 0 : i32
    %c0_i32_0 = arith.constant 0 : i32
    return %arg0, %c0_i32 : i32, i32
  }
  func.func @transform_1(%arg0: i32) -> (i32, i32) {
    %c0_i32 = arith.constant 0 : i32
    %c0_i32_0 = arith.constant 0 : i32
    %c0_i32_1 = arith.constant 0 : i32
    return %c0_i32, %c0_i32_0 : i32, i32
  }
  func.func @transform_2(%arg0: i32) -> (i32, i32) {
    %c0_i32 = arith.constant 0 : i32
    %c0_i32_0 = arith.constant 0 : i32
    %c0_i32_1 = arith.constant 0 : i32
    return %c0_i32, %c0_i32_0 : i32, i32
  }
  func.func @transform_3(%arg0: i32) -> (i32, i32) {
    %c0_i32 = arith.constant 0 : i32
    %c0_i32_0 = arith.constant 0 : i32
    %c0_i32_1 = arith.constant 0 : i32
    return %c0_i32, %c0_i32_0 : i32, i32
  }
  func.func @transform_4(%arg0: i32) -> (i32, i32) {
    %c0_i32 = arith.constant 0 : i32
    %c0_i32_0 = arith.constant 0 : i32
    %c0_i32_1 = arith.constant 0 : i32
    return %c0_i32, %c0_i32_0 : i32, i32
  }
  func.func @transform_5(%arg0: i32) -> (i32, i32) {
    %c0_i32 = arith.constant 0 : i32
    %c0_i32_0 = arith.constant 0 : i32
    %c0_i32_1 = arith.constant 0 : i32
    return %c0_i32, %c0_i32_0 : i32, i32
  }
  func.func @transform_6(%arg0: i32) -> (i32, i32) {
    %c0_i32 = arith.constant 0 : i32
    %c0_i32_0 = arith.constant 0 : i32
    %c0_i32_1 = arith.constant 0 : i32
    return %c0_i32, %c0_i32_0 : i32, i32
  }
  func.func @transform_7(%arg0: i32) -> (i32, i32) {
    %c0_i32 = arith.constant 0 : i32
    %c0_i32_0 = arith.constant 0 : i32
    return %c0_i32, %arg0 : i32, i32
  }
}

</mosaic_0001>

<llo_original>
// kernel: dynamics_forward.1
$region0: #{dynamics_forward.1}
  #allocation0 [shape = 'u32[]', space=smem, size = 0x4, offset = 0x4, fixed_abs, tag = 'smem constant byte address 0x4 - core index']
  #allocation1 [shape = 'u32[72,128]{1,0:T(1,128)}', space=vmem, size = 0x9000, scoped, tag = 'internal scratch']
  %s0 = inlined_call_operand.vmem [shape: f32[128,16], index: 0, kind: input, shape index: {}]
  %s1 = inlined_call_operand.vmem [shape: f32[32,16], index: 1, kind: input, shape index: {}]
  %s2 = inlined_call_operand.vmem [shape: f32[32,1], index: 2, kind: input, shape index: {}]
  %s3 = inlined_call_operand.vmem [shape: f32[32,32], index: 3, kind: input, shape index: {}]
  %s4 = inlined_call_operand.vmem [shape: f32[32,1], index: 4, kind: input, shape index: {}]
  %s5 = inlined_call_operand.vmem [shape: f32[16,32], index: 5, kind: input, shape index: {}]
  %s6 = inlined_call_operand.vmem [shape: f32[16,1], index: 6, kind: input, shape index: {}]
  %s7 = inlined_call_operand.vmem [shape: f32[16,128], index: 7, kind: output, shape index: {}]
  %s8 = sld [smem:[#allocation0]]
  $region38: #{dynamics_forward.1} parent=0
    _
  %s10 = ssub.s32 1, %s8
  %s11 = scalar_select 0, %s10, %s8
  // Predicated region
  $region2: #{dynamics_forward.1} parent=0 // pred_check
    _
  $region3: #{dynamics_forward.1} parent=0 // pred_check_branch
    %13 = sbr.rel (0) target = $region5
  $region4: #{dynamics_forward.1} parent=0 // pred_region
    _
  $region5: #{dynamics_forward.1} parent=0 // pred_fallthru
    _
  // Predicated region
  $region6: #{dynamics_forward.1} parent=0 // pred_check
    _
  $region7: #{dynamics_forward.1} parent=0 // pred_check_branch
    %15 = sbr.rel (0) target = $region9
  $region8: #{dynamics_forward.1} parent=0 // pred_region
    _
  $region9: #{dynamics_forward.1} parent=0 // pred_fallthru
    _
  // Predicated region
  $region10: #{dynamics_forward.1} parent=0 // pred_check
    _
  $region11: #{dynamics_forward.1} parent=0 // pred_check_branch
    %17 = sbr.rel (0) target = $region13
  $region12: #{dynamics_forward.1} parent=0 // pred_region
    _
  $region13: #{dynamics_forward.1} parent=0 // pred_fallthru
    _
  // Predicated region
  $region14: #{dynamics_forward.1} parent=0 // pred_check
    _
  $region15: #{dynamics_forward.1} parent=0 // pred_check_branch
    %19 = sbr.rel (0) target = $region17
  $region16: #{dynamics_forward.1} parent=0 // pred_region
    _
  $region17: #{dynamics_forward.1} parent=0 // pred_fallthru
    _
  // Predicated region
  $region18: #{dynamics_forward.1} parent=0 // pred_check
    _
  $region19: #{dynamics_forward.1} parent=0 // pred_check_branch
    %21 = sbr.rel (0) target = $region21
  $region20: #{dynamics_forward.1} parent=0 // pred_region
    _
  $region21: #{dynamics_forward.1} parent=0 // pred_fallthru
    _
  // Predicated region
  $region22: #{dynamics_forward.1} parent=0 // pred_check
    _
  $region23: #{dynamics_forward.1} parent=0 // pred_check_branch
    %23 = sbr.rel (0) target = $region25
  $region24: #{dynamics_forward.1} parent=0 // pred_region
    _
  $region25: #{dynamics_forward.1} parent=0 // pred_fallthru
    _
  // Predicated region
  $region26: #{dynamics_forward.1} parent=0 // pred_check
    _
  $region27: #{dynamics_forward.1} parent=0 // pred_check_branch
    %25 = sbr.rel (0) target = $region29
  $region28: #{dynamics_forward.1} parent=0 // pred_region
    _
  $region29: #{dynamics_forward.1} parent=0 // pred_fallthru
    _
  %v26 = vld [vmem:[%s0] sm:$0xff]
  %v27 = vld [vmem:[%s0 + $0x8] sm:$0xff]
  %v28 = vld [vmem:[%s0 + $0x10] sm:$0xff]
  %v29 = vld [vmem:[%s0 + $0x18] sm:$0xff]
  %v30 = vld [vmem:[%s0 + $0x20] sm:$0xff]
  %v31 = vld [vmem:[%s0 + $0x28] sm:$0xff]
  %v32 = vld [vmem:[%s0 + $0x30] sm:$0xff]
  %v33 = vld [vmem:[%s0 + $0x38] sm:$0xff]
  %v34 = vld [vmem:[%s0 + $0x40] sm:$0xff]
  %v35 = vld [vmem:[%s0 + $0x48] sm:$0xff]
  %v36 = vld [vmem:[%s0 + $0x50] sm:$0xff]
  %v37 = vld [vmem:[%s0 + $0x58] sm:$0xff]
  %v38 = vld [vmem:[%s0 + $0x60] sm:$0xff]
  %v39 = vld [vmem:[%s0 + $0x68] sm:$0xff]
  %v40 = vld [vmem:[%s0 + $0x70] sm:$0xff]
  %v41 = vld [vmem:[%s0 + $0x78] sm:$0xff]
  %v42 = vld [vmem:[%s1] sm:$0xff]
  %v43 = vld [vmem:[%s1 + $0x8] sm:$0xff]
  %v44 = vld [vmem:[%s1 + $0x10] sm:$0xff]
  %v45 = vld [vmem:[%s1 + $0x18] sm:$0xff]
  %v46 = vld [vmem:[%s2] sm:$0xff]
  %v47 = vld [vmem:[%s2 + $0x8] sm:$0xff]
  %v48 = vld [vmem:[%s2 + $0x10] sm:$0xff]
  %v49 = vld [vmem:[%s2 + $0x18] sm:$0xff]
  %51 = vset.pattern.permute.xlu0 0
  %52 = vperm.xlu0 %51, %v46
  %v53 = vpop.permute.xlu0 %52
  %56 = vset.pattern.permute.xlu0 0
  %57 = vperm.xlu0 %56, %v47
  %v58 = vpop.permute.xlu0 %57
  %61 = vset.pattern.permute.xlu0 0
  %62 = vperm.xlu0 %61, %v48
  %v63 = vpop.permute.xlu0 %62
  %66 = vset.pattern.permute.xlu0 0
  %67 = vperm.xlu0 %66, %v49
  %v68 = vpop.permute.xlu0 %67
  %vm70 = vcmask 130048
  %v72 = vsel %vm70, %v42, 0
  %v75 = vsel %vm70, %v43, 0
  %v78 = vsel %vm70, %v44, 0
  %v81 = vsel %vm70, %v45, 0
  %v84 = vsel %vm70, %v26, 0
  %v87 = vsel %vm70, %v27, 0
  %v90 = vsel %vm70, %v28, 0
  %v93 = vsel %vm70, %v29, 0
  %v96 = vsel %vm70, %v30, 0
  %v99 = vsel %vm70, %v31, 0
  %v102 = vsel %vm70, %v32, 0
  %v105 = vsel %vm70, %v33, 0
  %v108 = vsel %vm70, %v34, 0
  %v111 = vsel %vm70, %v35, 0
  %v114 = vsel %vm70, %v36, 0
  %v117 = vsel %vm70, %v37, 0
  %v120 = vsel %vm70, %v38, 0
  %v123 = vsel %vm70, %v39, 0
  %v126 = vsel %vm70, %v40, 0
  %v129 = vsel %vm70, %v41, 0
  %131 = vmatpush.xpose.msra.mxu0 %v129
  %132 = vmatpush.xpose.msra.mxu0 %v126
  %133 = vmatpush.xpose.msra.mxu0 %v123
  %134 = vmatpush.xpose.msra.mxu0 %v120
  %135 = vmatpush.xpose.msra.mxu0 %v117
  %136 = vmatpush.xpose.msra.mxu0 %v114
  %137 = vmatpush.xpose.msra.mxu0 %v111
  %138 = vmatpush.xpose.msra.mxu0 %v108
  %139 = vmatpush.xpose.msra.mxu0 %v105
  %140 = vmatpush.xpose.msra.mxu0 %v102
  %141 = vmatpush.xpose.msra.mxu0 %v99
  %142 = vmatpush.xpose.msra.mxu0 %v96
  %143 = vmatpush.xpose.msra.mxu0 %v93
  %144 = vmatpush.xpose.msra.mxu0 %v90
  %145 = vmatpush.xpose.msra.mxu0 %v87
  %146 = vmatpush.xpose.msra.mxu0 %v84
  %147 = vmatmul.f32.gmra.mxu0 %v72
  %v148 = vpop.f32.mrf.mxu0
  %v149 = vadd.f32 %v53, %v148
  %150 = vmatmul.f32.gmra.mxu0 %v75
  %v151 = vpop.f32.mrf.mxu0
  %v152 = vadd.f32 %v58, %v151
  %153 = vmatmul.f32.gmra.mxu0 %v78
  %v154 = vpop.f32.mrf.mxu0
  %v155 = vadd.f32 %v63, %v154
  %156 = vmatmul.f32.gmra.mxu0 %v81
  %v157 = vpop.f32.mrf.mxu0
  %v158 = vadd.f32 %v68, %v157
  %159 = vdwg.mxu0
  %v160 = vmax.f32 %v149, 0.0
  %v161 = vmax.f32 %v152, 0.0
  %v162 = vmax.f32 %v155, 0.0
  %v163 = vmax.f32 %v158, 0.0
  %v164 = vld [vmem:[%s3] sm:$0xff]
  %v165 = vld [vmem:[%s3 + $0x8] sm:$0xff]
  %v166 = vld [vmem:[%s3 + $0x10] sm:$0xff]
  %v167 = vld [vmem:[%s3 + $0x18] sm:$0xff]
  %v168 = vld [vmem:[%s4] sm:$0xff]
  %v169 = vld [vmem:[%s4 + $0x8] sm:$0xff]
  %v170 = vld [vmem:[%s4 + $0x10] sm:$0xff]
  %v171 = vld [vmem:[%s4 + $0x18] sm:$0xff]
  %173 = vset.pattern.permute.xlu0 0
  %174 = vperm.xlu0 %173, %v168
  %v175 = vpop.permute.xlu0 %174
  %178 = vset.pattern.permute.xlu0 0
  %179 = vperm.xlu0 %178, %v169
  %v180 = vpop.permute.xlu0 %179
  %183 = vset.pattern.permute.xlu0 0
  %184 = vperm.xlu0 %183, %v170
  %v185 = vpop.permute.xlu0 %184
  %188 = vset.pattern.permute.xlu0 0
  %189 = vperm.xlu0 %188, %v171
  %v190 = vpop.permute.xlu0 %189
  %vm192 = vcmask 261120
  %v194 = vsel %vm192, %v164, 0
  %v197 = vsel %vm192, %v165, 0
  %v200 = vsel %vm192, %v166, 0
  %v203 = vsel %vm192, %v167, 0
  %205 = vmatpush.msra.mxu0 0.0
  %206 = vmatpush.msra.mxu0 0.0
  %207 = vmatpush.msra.mxu0 0.0
  %208 = vmatpush.msra.mxu0 0.0
  %209 = vmatpush.msra.mxu0 0.0
  %210 = vmatpush.msra.mxu0 0.0
  %211 = vmatpush.msra.mxu0 0.0
  %212 = vmatpush.msra.mxu0 0.0
  %213 = vmatpush.msra.mxu0 0.0
  %214 = vmatpush.msra.mxu0 0.0
  %215 = vmatpush.msra.mxu0 0.0
  %216 = vmatpush.msra.mxu0 0.0
  %217 = vmatpush.msra.mxu0 %v163
  %218 = vmatpush.msra.mxu0 %v162
  %219 = vmatpush.msra.mxu0 %v161
  %220 = vmatpush.msra.mxu0 %v160
  %221 = vmatmul.f32.gmra.mxu0 %v194
  %v222 = vpop.f32.mrf.mxu0
  %v223 = vadd.f32 %v175, %v222
  %224 = vmatmul.f32.gmra.mxu0 %v197
  %v225 = vpop.f32.mrf.mxu0
  %v226 = vadd.f32 %v180, %v225
  %227 = vmatmul.f32.gmra.mxu0 %v200
  %v228 = vpop.f32.mrf.mxu0
  %v229 = vadd.f32 %v185, %v228
  %230 = vmatmul.f32.gmra.mxu0 %v203
  %v231 = vpop.f32.mrf.mxu0
  %v232 = vadd.f32 %v190, %v231
  %233 = vdwg.mxu0
  %v234 = vmax.f32 %v223, 0.0
  %v235 = vmax.f32 %v226, 0.0
  %v236 = vmax.f32 %v229, 0.0
  %v237 = vmax.f32 %v232, 0.0
  %v238 = vld [vmem:[%s5] sm:$0xff]
  %v239 = vld [vmem:[%s5 + $0x8] sm:$0xff]
  %v240 = vld [vmem:[%s6] sm:$0xff]
  %v241 = vld [vmem:[%s6 + $0x8] sm:$0xff]
  %243 = vset.pattern.permute.xlu0 0
  %244 = vperm.xlu0 %243, %v240
  %v245 = vpop.permute.xlu0 %244
  %248 = vset.pattern.permute.xlu0 0
  %249 = vperm.xlu0 %248, %v241
  %v250 = vpop.permute.xlu0 %249
  %v253 = vsel %vm192, %v238, 0
  %v256 = vsel %vm192, %v239, 0
  %258 = vmatpush.msra.mxu0 0.0
  %259 = vmatpush.msra.mxu0 0.0
  %260 = vmatpush.msra.mxu0 0.0
  %261 = vmatpush.msra.mxu0 0.0
  %262 = vmatpush.msra.mxu0 0.0
  %263 = vmatpush.msra.mxu0 0.0
  %264 = vmatpush.msra.mxu0 0.0
  %265 = vmatpush.msra.mxu0 0.0
  %266 = vmatpush.msra.mxu0 0.0
  %267 = vmatpush.msra.mxu0 0.0
  %268 = vmatpush.msra.mxu0 0.0
  %269 = vmatpush.msra.mxu0 0.0
  %270 = vmatpush.msra.mxu0 %v237
  %271 = vmatpush.msra.mxu0 %v236
  %272 = vmatpush.msra.mxu0 %v235
  %273 = vmatpush.msra.mxu0 %v234
  %274 = vmatmul.f32.gmra.mxu0 %v253
  %v275 = vpop.f32.mrf.mxu0
  %v276 = vadd.f32 %v245, %v275
  %277 = vmatmul.f32.gmra.mxu0 %v256
  %v278 = vpop.f32.mrf.mxu0
  %v279 = vadd.f32 %v250, %v278
  %280 = vdwg.mxu0
  %281 = vst [vmem:[%s7] sm:$0xff] %v276
  %282 = vst [vmem:[%s7 + $0x8] sm:$0xff] %v279
  // Predicated region
  $region30: #{dynamics_forward.1} parent=0 // pred_check
    _
  $region31: #{dynamics_forward.1} parent=0 // pred_check_branch
    %284 = sbr.rel (0) target = $region33
  $region32: #{dynamics_forward.1} parent=0 // pred_region
    _
  $region33: #{dynamics_forward.1} parent=0 // pred_fallthru
    _
  // Predicated region
  $region34: #{dynamics_forward.1} parent=0 // pred_check
    _
  $region35: #{dynamics_forward.1} parent=0 // pred_check_branch
    %286 = sbr.rel (0) target = $region37
  $region36: #{dynamics_forward.1} parent=0 // pred_region
    _
  $region37: #{dynamics_forward.1} parent=0 // pred_fallthru
    _

</llo_original>
